<compile_context>
chip_gen: v5e
topology: v5e:2x2
jax: 0.10.0
libtpu: 0.0.40
codegen_flags: <defaults>
</compile_context>

<pallas_src>
import functools

import jax
import jax.numpy as jnp
from jax import lax
from jax.experimental import pallas as pl
from jax.experimental.pallas import tpu as pltpu


# ---------------------------------------------------------------------------
# Kernel bodies
# ---------------------------------------------------------------------------
def _mean_pool_full_n_kernel(x_ref, o_ref, *, inv_n):
    """Block (bt, N, ft) -> (bt, 1, ft): reduce the full N extent in one shot."""
    x = x_ref[...]
    if x.dtype != jnp.float32:
        x = x.astype(jnp.float32)          # widen once (v5e has no bf16 VALU)
    # Per-(batch, column) reduction: padded batch rows / F columns only ever
    # produce values whose output stores are masked off.
    s = jnp.sum(x, axis=1, keepdims=True)  # (bt, 1, ft)
    o_ref[...] = (s * inv_n).astype(o_ref.dtype)


def _mean_pool_tiled_n_kernel(x_ref, o_ref, acc_ref, *, n_total, nt):
    """N tiled on the last ("arbitrary") grid axis; f32 accumulator in scratch."""
    k = pl.program_id(2)

    @pl.when(k == 0)
    def _():
        acc_ref[...] = jnp.zeros_like(acc_ref)

    x = x_ref[...]
    if x.dtype != jnp.float32:
        x = x.astype(jnp.float32)
    # Mask rows past the true N extent; only the final (partial) chunk has any.
    valid = n_total - k * nt                      # traced scalar
    row = lax.broadcasted_iota(jnp.int32, x.shape, 1)
    x = jnp.where(row < valid, x, 0.0)
    acc_ref[...] += jnp.sum(x, axis=1, keepdims=True)

    @pl.when(k == pl.num_programs(2) - 1)
    def _():
        o_ref[...] = (acc_ref[...] * (1.0 / n_total)).astype(o_ref.dtype)


# ---------------------------------------------------------------------------
# Wrapper
# ---------------------------------------------------------------------------
def _default_block_bytes() -> int:
    """Per-generation block-byte target (bigger blocks amortize the ~0.35 us
    per-grid-step overhead against faster HBM on newer chips)."""
    try:
        kind = jax.devices()[0].device_kind.lower()
    except Exception:
        return 4 << 20
    if "v7" in kind:
        return 8 << 20
    if "v6" in kind:
        return 6 << 20
    return 4 << 20          # v5e: stay comfortably under its scoped-VMEM ceiling


def pool_layer2(ef: jax.Array, *, target_block_bytes: int | None = None) -> jax.Array:
    """Mean over dim=-2 with keepdim=True, computed in a Pallas TPU kernel.

    ef: (B, N, F) float array  ->  (B, 1, F)
    """
    B, N, F = ef.shape
    dtype = ef.dtype
    itemsize = jnp.dtype(dtype).itemsize
    if target_block_bytes is None:
        target_block_bytes = _default_block_bytes()
    budget = max(int(target_block_bytes), 128 * 128 * itemsize)

    # VMEM footprint of one block: last dim pads to 128 lanes; second-last dim
    # pads to the sublane tile (8 for f32; use 32 to be safe for bf16/int8).
    def vmem_bytes(bt, nt, ft):
        lane_w = pl.cdiv(ft, 128) * 128
        sub = pl.cdiv(nt, 32) * 32
        return bt * sub * lane_w * itemsize

    # Lane tile of F: full extent when F <= 128, otherwise multiples of 128.
    ft_base = F if F <= 128 else 128

    out_shape = jax.ShapeDtypeStruct((B, 1, F), dtype)
    vmem_limit = 28 * 1024 * 1024  # < 64 MiB (v7x physical), < 128 MiB (v5e/v6e)

    if vmem_bytes(1, N, ft_base) <= budget:
        # ---- Path A: full-N blocks, no accumulator -------------------------
        units = max(1, int(budget // vmem_bytes(1, N, ft_base)))
        if F > 128:
            n_lane_tiles = pl.cdiv(F, 128)
            take = min(n_lane_tiles, units)
            ft = F if take >= n_lane_tiles else take * 128
            units = max(1, units // take)
        else:
            ft = F
        bt = int(min(B, units))

        # v7x megacore: avoid a 1-step grid on multi-MiB inputs so both
        # TensorCores get work; a harmless extra step on v5e/v6e.
        total_bytes = B * N * F * itemsize
        if pl.cdiv(B, bt) * pl.cdiv(F, ft) == 1 and total_bytes > (2 << 20):
            if B > 1:
                bt = pl.cdiv(B, 2)
            elif F > 128:
                ft = 128 * max(1, pl.cdiv(F, 128) // 2)

        grid = (pl.cdiv(B, bt), pl.cdiv(F, ft))
        kernel = functools.partial(_mean_pool_full_n_kernel, inv_n=1.0 / N)
        return pl.pallas_call(
            kernel,
            out_shape=out_shape,
            grid_spec=pltpu.PrefetchScalarGridSpec(
                num_scalar_prefetch=0,
                grid=grid,
                in_specs=[pl.BlockSpec((bt, N, ft), lambda b, j: (b, 0, j))],
                out_specs=pl.BlockSpec((bt, 1, ft), lambda b, j: (b, 0, j)),
            ),
            compiler_params=pltpu.CompilerParams(
                dimension_semantics=("parallel", "parallel"),
                vmem_limit_bytes=vmem_limit,
            ),
        )(ef)

    # ---- Path B: N too large for one block -> tile N, reduction axis last --
    ft = ft_base
    lane_w = pl.cdiv(ft, 128) * 128
    nt = max(32, (budget // (lane_w * itemsize)) // 32 * 32)
    nt = int(min(nt, pl.cdiv(N, 32) * 32))
    grid = (B, pl.cdiv(F, ft), pl.cdiv(N, nt))
    kernel = functools.partial(_mean_pool_tiled_n_kernel, n_total=N, nt=nt)
    return pl.pallas_call(
        kernel,
        out_shape=out_shape,
        grid_spec=pltpu.PrefetchScalarGridSpec(
            num_scalar_prefetch=0,
            grid=grid,
            in_specs=[pl.BlockSpec((1, nt, ft), lambda b, j, k: (b, k, j))],
            out_specs=pl.BlockSpec((1, 1, ft), lambda b, j, k: (b, 0, j)),
            scratch_shapes=[pltpu.VMEM((1, 1, ft), jnp.float32)],
        ),
        compiler_params=pltpu.CompilerParams(
            dimension_semantics=("parallel", "parallel", "arbitrary"),
            vmem_limit_bytes=vmem_limit,
        ),
    )(ef)


if __name__ == "__main__":
    key = jax.random.PRNGKey(0)
    B, N, F = 2, 118, 32  # 118 buses (IEEE 118-bus system), small feature dim
    ef = jax.random.normal(key, (B, N, F), dtype=jnp.float32)

    # TODO(synk): `self.trans` (118, 1) buffer exists in the module but is never
    # used in forward; kept here only for parity.
    trans = jnp.ones((118, 1), dtype=jnp.float32)

    # Default path (single full-extent block, no transpose, no extra dispatch).
    out = jax.block_until_ready(pool_layer2(ef))
    ref = jnp.mean(ef, axis=-2, keepdims=True)
    assert out.shape == (B, 1, F), out.shape
    assert jnp.allclose(out, ref, atol=1e-5, rtol=1e-5), "mismatch vs jnp reference"

    # Also exercise the N-tiled accumulator path (forced tiny block budget,
    # non-multiple N to check the partial-chunk row masking).
    ef2 = jax.random.normal(jax.random.PRNGKey(1), (2, 300, 256), dtype=jnp.float32)
    out2 = jax.block_until_ready(pool_layer2(ef2, target_block_bytes=64 * 1024))
    ref2 = jnp.mean(ef2, axis=-2, keepdims=True)
    assert out2.shape == (2, 1, 256), out2.shape
    assert jnp.allclose(out2, ref2, atol=1e-5, rtol=1e-5), "mismatch (N-tiled path)"

    print("KERNEL_OK")
</pallas_src>

<mosaic_0001>
module attributes {stable_mosaic.version = 11 : i64} {
  func.func @_mean_pool_full_n_kernel(%arg0: i32, %arg1: i32, %arg2: memref<2x118x32xf32, #tpu.memory_space<vmem>>, %arg3: memref<2x1x32xf32, #tpu.memory_space<vmem>>) attributes {dimension_semantics = [#tpu.dimension_semantics<parallel>, #tpu.dimension_semantics<parallel>], iteration_bounds = array<i64: 1, 1>, scalar_prefetch = 0 : i64, scratch_operands = 0 : i64, tpu.core_type = #tpu.core_type<tc>, window_params = [{transform_indices = @transform_0, window_bounds = array<i64: 2, 118, 32>}, {transform_indices = @transform_1, window_bounds = array<i64: 2, 1, 32>}]} {
    %c0 = arith.constant 0 : index
    %c0_0 = arith.constant 0 : index
    %c0_1 = arith.constant 0 : index
    %0 = vector.load %arg2[%c0, %c0_0, %c0_1] : memref<2x118x32xf32, #tpu.memory_space<vmem>>, vector<2x118x32xf32>
    %cst = arith.constant dense<0.000000e+00> : vector<2x32xf32>
    %1 = vector.multi_reduction <add>, %0, %cst [1] : vector<2x118x32xf32> to vector<2x32xf32>
    %2 = vector.shape_cast %1 : vector<2x32xf32> to vector<2x1x32xf32>
    %cst_2 = arith.constant 0.00847457629 : f32
    %3 = vector.broadcast %cst_2 : f32 to vector<2x1x32xf32>
    %4 = arith.mulf %2, %3 : vector<2x1x32xf32>
    %c0_3 = arith.constant 0 : index
    %c0_4 = arith.constant 0 : index
    %c0_5 = arith.constant 0 : index
    %5 = vector.load %arg3[%c0_3, %c0_4, %c0_5] : memref<2x1x32xf32, #tpu.memory_space<vmem>>, vector<2x1x32xf32>
    tpu.vector_store %arg3[%c0_3, %c0_4, %c0_5], %4 {strides = array<i32>} : memref<2x1x32xf32, #tpu.memory_space<vmem>>, vector<2x1x32xf32>,
    return
  }
  func.func @transform_0(%arg0: i32, %arg1: i32) -> (i32, i32, i32) {
    %c0_i32 = arith.constant 0 : i32
    %c0_i32_0 = arith.constant 0 : i32
    return %arg0, %c0_i32, %arg1 : i32, i32, i32
  }
  func.func @transform_1(%arg0: i32, %arg1: i32) -> (i32, i32, i32) {
    %c0_i32 = arith.constant 0 : i32
    %c0_i32_0 = arith.constant 0 : i32
    return %arg0, %c0_i32, %arg1 : i32, i32, i32
  }
}

</mosaic_0001>

<llo_original>
// kernel: tpu_custom_call.1
$region0: #{tpu_custom_call.1}
  #allocation0 [shape = 'u32[]', space=smem, size = 0x4, offset = 0x4, fixed_abs, tag = 'smem constant byte address 0x4 - core index']
  #allocation1 [shape = 'u32[72,128]{1,0:T(1,128)}', space=vmem, size = 0x9000, scoped, tag = 'internal scratch']
  %s0 = inlined_call_operand.vmem [shape: f32[2,118,32], index: 0, kind: input, shape index: {}]
  %s1 = inlined_call_operand.hbm [shape: f32[2,1,32], index: 1, kind: output, shape index: {}]
  %s2 = sld [smem:[#allocation0]]
  $region14: #{tpu_custom_call.1} parent=0
    _
  %s4 = ssub.s32 1, %s2
  %s5 = scalar_select 0, %s4, %s2
  $region1: #{tpu_custom_call.1} parent=0
    #allocation2 [shape = 'u8[1024]{0}', space=vmem, size = 0x400, scoped, tag = 'output window, operand 0, single buffered']
    #allocation3 [shape = 's32[1]{0}', space=sflag, size = 0x4, scoped, tag = 'scoped memory for tpu_custom_call.1']
    %6 = vsyncpa [#allocation3], 0
    // Predicated region
    $region2: #{tpu_custom_call.1} parent=1 // pred_check
      _
    $region3: #{tpu_custom_call.1} parent=1 // pred_check_branch
      %8 = sbr.rel (0) target = $region5
    $region4: #{tpu_custom_call.1} parent=1 // pred_region
      _
    $region5: #{tpu_custom_call.1} parent=1 // pred_fallthru
      _
    %v9 = vld [vmem:[%s0] sm:$0xff]
    %v10 = vld [vmem:[%s0 + $0x8] sm:$0xff]
    %v11 = vld [vmem:[%s0 + $0x10] sm:$0xff]
    %v12 = vld [vmem:[%s0 + $0x18] sm:$0xff]
    %v13 = vld [vmem:[%s0 + $0x20] sm:$0xff]
    %v14 = vld [vmem:[%s0 + $0x28] sm:$0xff]
    %v15 = vld [vmem:[%s0 + $0x30] sm:$0xff]
    %v16 = vld [vmem:[%s0 + $0x38] sm:$0xff]
    %v17 = vld [vmem:[%s0 + $0x40] sm:$0xff]
    %v18 = vld [vmem:[%s0 + $0x48] sm:$0xff]
    %v19 = vld [vmem:[%s0 + $0x50] sm:$0xff]
    %v20 = vld [vmem:[%s0 + $0x58] sm:$0xff]
    %v21 = vld [vmem:[%s0 + $0x60] sm:$0xff]
    %v22 = vld [vmem:[%s0 + $0x68] sm:$0xff]
    %v23 = vld [vmem:[%s0 + $0x70] sm:$0x3f]
    %v24 = vld [vmem:[%s0 + $0x78] sm:$0xff]
    %v25 = vld [vmem:[%s0 + $0x80] sm:$0xff]
    %v26 = vld [vmem:[%s0 + $0x88] sm:$0xff]
    %v27 = vld [vmem:[%s0 + $0x90] sm:$0xff]
    %v28 = vld [vmem:[%s0 + $0x98] sm:$0xff]
    %v29 = vld [vmem:[%s0 + $0xa0] sm:$0xff]
    %v30 = vld [vmem:[%s0 + $0xa8] sm:$0xff]
    %v31 = vld [vmem:[%s0 + $0xb0] sm:$0xff]
    %v32 = vld [vmem:[%s0 + $0xb8] sm:$0xff]
    %v33 = vld [vmem:[%s0 + $0xc0] sm:$0xff]
    %v34 = vld [vmem:[%s0 + $0xc8] sm:$0xff]
    %v35 = vld [vmem:[%s0 + $0xd0] sm:$0xff]
    %v36 = vld [vmem:[%s0 + $0xd8] sm:$0xff]
    %v37 = vld [vmem:[%s0 + $0xe0] sm:$0xff]
    %v38 = vld [vmem:[%s0 + $0xe8] sm:$0x3f]
    %vm39 = vcmask 261120
    %v40 = vsel %vm39, %v9, 0.0
    %v41 = vsel %vm39, %v10, 0.0
    %v42 = vadd.f32 %v40, %v41
    %v43 = vsel %vm39, %v11, 0.0
    %v44 = vadd.f32 %v42, %v43
    %v45 = vsel %vm39, %v12, 0.0
    %v46 = vadd.f32 %v44, %v45
    %v47 = vsel %vm39, %v13, 0.0
    %v48 = vadd.f32 %v46, %v47
    %v49 = vsel %vm39, %v14, 0.0
    %v50 = vadd.f32 %v48, %v49
    %v51 = vsel %vm39, %v15, 0.0
    %v52 = vadd.f32 %v50, %v51
    %v53 = vsel %vm39, %v16, 0.0
    %v54 = vadd.f32 %v52, %v53
    %v55 = vsel %vm39, %v17, 0.0
    %v56 = vadd.f32 %v54, %v55
    %v57 = vsel %vm39, %v18, 0.0
    %v58 = vadd.f32 %v56, %v57
    %v59 = vsel %vm39, %v19, 0.0
    %v60 = vadd.f32 %v58, %v59
    %v61 = vsel %vm39, %v20, 0.0
    %v62 = vadd.f32 %v60, %v61
    %v63 = vsel %vm39, %v21, 0.0
    %v64 = vadd.f32 %v62, %v63
    %v65 = vsel %vm39, %v22, 0.0
    %v66 = vadd.f32 %v64, %v65
    %vm67 = vcmask 259072
    %v68 = vsel %vm67, %v23, 0.0
    %v69 = vadd.f32 %v66, %v68
    %v70 = vrot.slane %v69, 4
    %v71 = vadd.f32 %v69, %v70
    %v72 = vrot.slane %v71, 2
    %v73 = vadd.f32 %v71, %v72
    %v74 = vrot.slane %v73, 1
    %v75 = vadd.f32 %v73, %v74
    %v76 = vsel %vm39, %v24, 0.0
    %v77 = vsel %vm39, %v25, 0.0
    %v78 = vadd.f32 %v76, %v77
    %v79 = vsel %vm39, %v26, 0.0
    %v80 = vadd.f32 %v78, %v79
    %v81 = vsel %vm39, %v27, 0.0
    %v82 = vadd.f32 %v80, %v81
    %v83 = vsel %vm39, %v28, 0.0
    %v84 = vadd.f32 %v82, %v83
    %v85 = vsel %vm39, %v29, 0.0
    %v86 = vadd.f32 %v84, %v85
    %v87 = vsel %vm39, %v30, 0.0
    %v88 = vadd.f32 %v86, %v87
    %v89 = vsel %vm39, %v31, 0.0
    %v90 = vadd.f32 %v88, %v89
    %v91 = vsel %vm39, %v32, 0.0
    %v92 = vadd.f32 %v90, %v91
    %v93 = vsel %vm39, %v33, 0.0
    %v94 = vadd.f32 %v92, %v93
    %v95 = vsel %vm39, %v34, 0.0
    %v96 = vadd.f32 %v94, %v95
    %v97 = vsel %vm39, %v35, 0.0
    %v98 = vadd.f32 %v96, %v97
    %v99 = vsel %vm39, %v36, 0.0
    %v100 = vadd.f32 %v98, %v99
    %v101 = vsel %vm39, %v37, 0.0
    %v102 = vadd.f32 %v100, %v101
    %v103 = vsel %vm67, %v38, 0.0
    %v104 = vadd.f32 %v102, %v103
    %v105 = vrot.slane %v104, 4
    %v106 = vadd.f32 %v104, %v105
    %v107 = vrot.slane %v106, 2
    %v108 = vadd.f32 %v106, %v107
    %v109 = vrot.slane %v108, 1
    %v110 = vadd.f32 %v108, %v109
    %v111 = vmul.f32 %v75, 0.008474576
    %v112 = vmul.f32 %v110, 0.008474576
    %vm113 = vcmask 253952
    %114 = vst.msk [vmem:[#allocation2] sm:$0x1] %vm113, %v111
    %115 = vst.msk [vmem:[#allocation2 + $0x1] sm:$0x1] %vm113, %v112
    // Predicated region
    $region6: #{tpu_custom_call.1} parent=1 // pred_check
      _
    $region7: #{tpu_custom_call.1} parent=1 // pred_check_branch
      %117 = sbr.rel (0) target = $region9
    $region8: #{tpu_custom_call.1} parent=1 // pred_region
      %119 = vsyncadd [#allocation3], 0
      %s120 = sshll.u32 [#allocation2], 4
      %s121 = int_to_ptr.vmem [resolvable:$true] %s120
      %s122 = sshll.u32 %s1, 4
      %s123 = int_to_ptr.hbm [resolvable:$true] %s122
      %128 = dma.vmem_to_hbm [thread:$0]  %s121, 32, %s123, [#allocation3], 16, 16, 1
    $region9: #{tpu_custom_call.1} parent=1 // pred_fallthru
      _
    // Predicated region
    $region10: #{tpu_custom_call.1} parent=1 // pred_check
      _
    $region11: #{tpu_custom_call.1} parent=1 // pred_check_branch
      %130 = sbr.rel (0) target = $region13
    $region12: #{tpu_custom_call.1} parent=1 // pred_region
      %132 = dma.done [#allocation3], 32
    $region13: #{tpu_custom_call.1} parent=1 // pred_fallthru
      _
    %133 = vsyncpa [#allocation3], 1

</llo_original>
